<compile_context>
chip_gen: v5e
topology: v5e:2x2
jax: 0.10.0
libtpu: 0.0.40
codegen_flags: <defaults>
</compile_context>

<pallas_src>
import functools

import jax
import jax.numpy as jnp
from jax.experimental import pallas as pl
from jax.experimental.pallas import tpu as pltpu


def _wap_kernel(x_ref, w_ref, b_ref, o_ref, acc_ref, *, inv_hw):
    # x_ref  : (TN, C, THW) channel-first tile (C on sublanes, HW on the 128-wide lanes)
    # w_ref  : (C, C)       Conv2d 1x1 weight (C_out, C_in)
    # b_ref  : (C, 1)       bias as a column
    # o_ref  : (TN, C)      pooled output block (lane-dense store)
    # acc_ref: (C, TNP) f32 accumulator scratch, persists across the HW grid axis
    hw_step = pl.program_id(1)

    @pl.when(hw_step == 0)
    def _init():
        acc_ref[...] = jnp.zeros_like(acc_ref)

    tn, c, thw = x_ref.shape
    _, tnp = acc_ref.shape

    w = w_ref[...]                                            # native dtype -> MXU
    # Hoisted out of the batch loop (JAX does not CSE broadcast_in_dim).
    b_b = jnp.broadcast_to(b_ref[...].astype(jnp.float32), (c, thw))
    # Lane-id grid used to place each per-n reduced column into `cols` (pure VPU select).
    lane_ids = jax.lax.broadcasted_iota(jnp.int32, (c, tnp), 1)

    def body(n, cols):
        xn = x_ref[n]                                         # (C, THW), native dtype
        # 1x1 conv over channels == (C_out, C_in) @ (C_in, THW) on the MXU, single pass.
        s = jnp.dot(w, xn, preferred_element_type=jnp.float32) + b_b      # (C, THW) f32
        # sigmoid(s) == 0.5 * tanh(0.5*s) + 0.5 : EUP transcendental, no VALU divide.
        mask = 0.5 * jnp.tanh(0.5 * s) + 0.5
        weighted = mask * xn.astype(jnp.float32)              # (C, THW) f32
        # Spatial partial sum as an XLU lane-reduce; MXU stays free for the conv.
        col = jnp.sum(weighted, axis=-1, keepdims=True)       # (C, 1) f32
        return jnp.where(lane_ids == n, col, cols)            # write column n

    # fori_loop (not a static unroll) bounds the live set to one iteration's f32
    # intermediates, keeping internal VMEM scratch small on 64 MiB (v7x) parts.
    cols0 = jnp.zeros((c, tnp), dtype=jnp.float32)
    cols = jax.lax.fori_loop(0, tn, body, cols0)
    acc_ref[...] += cols                                      # one batched RMW per HW step

    @pl.when(hw_step == pl.num_programs(1) - 1)
    def _finalize():
        # Single (C, TNP) -> (TNP, C) transpose; the (TN, C) store is lane-dense.
        pooled = jnp.transpose(acc_ref[...] * inv_hw)
        o_ref[...] = pooled[:tn].astype(o_ref.dtype)


def _pick_n_tile(n):
    # Output block rows must be sublane-dense (multiple of 8) or the whole batch axis.
    if n % 8 == 0 and n >= 16:
        return 8   # >= 2 "parallel" batch grid steps -> feeds both v7x TensorCores
    # TODO(synk): for N == 8 or N not a multiple of 8, split the HW reduction across
    # v7x's two TensorCores (or pad N to a multiple of 8) so megacore is not idle.
    return n


def _pick_hw_tile(hw_padded, tile_n, c, itemsize, budget_bytes=8 * 1024 * 1024):
    # Biggest THW (multiple of 128) dividing the padded HW whose double-buffered x block
    # stays within ~8 MiB. Together with ~3*C*THW*4 bytes of per-iteration f32
    # intermediates this fits comfortably in v7x's 32 MiB scoped VMEM while remaining on
    # the HBM-roofline plateau.
    for thw in (2048, 1024, 512, 256, 128):
        if hw_padded % thw == 0 and 2 * tile_n * c * thw * itemsize <= budget_bytes:
            return thw
    # TODO(synk): for very large C the x / w blocks may still not fit; tile C_out too.
    return 128


def _vmem_limit_bytes():
    # Per-generation scoped-VMEM limit: half of physical (32 MiB on v7x), capped at
    # 48 MiB on 128 MiB parts; never assumes a 128 MiB chip.
    try:
        cap = pltpu.get_tpu_info().vmem_capacity_bytes
    except Exception:
        cap = 64 * 1024 * 1024
    return min(cap // 2, 48 * 1024 * 1024)


def weighted_avg_pooling(x_nchw, weight, bias, *, tile_n=None, tile_hw=None):
    """x_nchw: (N, C, H, W); weight: (C, C) from Conv2d 1x1; bias: (C,). Returns (N, C)."""
    N, C, H, W = x_nchw.shape
    HW = H * W

    # Channel-first (C-sublane, HW-lane) layout: the reshape is free (no NCHW transpose).
    x_flat = x_nchw.reshape(N, C, HW)
    # Lane density + full MXU column use: pad HW to a multiple of 128. Zero columns
    # contribute exactly 0 to sum(mask * x), and we divide by the *true* HW.
    HW_pad = ((HW + 127) // 128) * 128
    if HW_pad != HW:
        x_flat = jnp.pad(x_flat, ((0, 0), (0, 0), (0, HW_pad - HW)))

    TN = tile_n if tile_n is not None else _pick_n_tile(N)
    THW = (tile_hw if tile_hw is not None
           else _pick_hw_tile(HW_pad, TN, C, x_flat.dtype.itemsize))
    assert N % TN == 0 and (TN == N or TN % 8 == 0), (N, TN)
    assert HW_pad % THW == 0 and (THW == HW_pad or THW % 128 == 0), (HW_pad, THW)

    TNP = ((TN + 7) // 8) * 8          # accumulator lane width (transpose-friendly)
    b_col = bias.reshape(C, 1)

    kernel = functools.partial(_wap_kernel, inv_hw=1.0 / float(HW))
    return pl.pallas_call(
        kernel,
        out_shape=jax.ShapeDtypeStruct((N, C), x_nchw.dtype),
        grid_spec=pltpu.PrefetchScalarGridSpec(
            num_scalar_prefetch=0,
            grid=(N // TN, HW_pad // THW),              # reduction (HW) axis last
            in_specs=[
                pl.BlockSpec((TN, C, THW), lambda ni, hi: (ni, 0, hi)),
                pl.BlockSpec((C, C), lambda ni, hi: (0, 0)),
                pl.BlockSpec((C, 1), lambda ni, hi: (0, 0)),
            ],
            out_specs=pl.BlockSpec((TN, C), lambda ni, hi: (ni, 0)),
            scratch_shapes=[pltpu.VMEM((C, TNP), jnp.float32)],
        ),
        compiler_params=pltpu.CompilerParams(
            dimension_semantics=("parallel", "arbitrary"),
            vmem_limit_bytes=_vmem_limit_bytes(),
        ),
    )(x_flat, weight, b_col)


def _reference(x_nchw, weight, bias):
    # Pure-JAX reference of the PyTorch forward (f32, highest precision).
    N, C, H, W = x_nchw.shape
    xf = x_nchw.astype(jnp.float32)
    conv = jnp.einsum("oc,nchw->nohw", weight.astype(jnp.float32), xf,
                      precision=jax.lax.Precision.HIGHEST)
    conv = conv + bias.astype(jnp.float32)[None, :, None, None]
    mask = jax.nn.sigmoid(conv)
    return jnp.sum(mask * xf, axis=(3, 2)) / (H * W)


if __name__ == "__main__":
    key = jax.random.PRNGKey(0)

    # (N, C, H, W, tile_n, tile_hw, nonzero_bias, dtype, atol, rtol)
    configs = [
        (2, 128, 8, 8, None, None, False, jnp.float32, 3e-4, 3e-3),    # HW=64 -> padded to 128
        (4, 128, 16, 16, None, 128, True, jnp.float32, 3e-4, 3e-3),    # 2 HW reduction steps
        (16, 128, 8, 8, None, None, False, jnp.float32, 3e-4, 3e-3),   # 2 parallel batch steps
        (8, 128, 16, 16, None, None, True, jnp.bfloat16, 2e-3, 2e-2),  # bf16 fast path
    ]

    for idx, (N, C, H, W, tn, thw, use_bias, dtype, atol, rtol) in enumerate(configs):
        kx, kw, kb, key = jax.random.split(jax.random.fold_in(key, idx), 4)
        x = jax.random.normal(kx, (N, C, H, W), dtype=jnp.float32)
        # weights_init_kaiming for Conv: normal(std=0.001); module inits bias to 0.
        weight = 0.001 * jax.random.normal(kw, (C, C), dtype=jnp.float32)
        bias = (0.01 * jax.random.normal(kb, (C,), dtype=jnp.float32)
                if use_bias else jnp.zeros((C,), dtype=jnp.float32))

        x_d = x.astype(dtype)
        w_d = weight.astype(dtype)
        b_d = bias.astype(dtype)

        out = weighted_avg_pooling(x_d, w_d, b_d, tile_n=tn, tile_hw=thw)
        out = jax.block_until_ready(out)
        assert out.shape == (N, C) and out.dtype == dtype

        # Reference computed in f32 from the same (possibly bf16-quantised) inputs.
        ref = _reference(x_d, w_d, b_d)
        assert jnp.allclose(out.astype(jnp.float32), ref, atol=atol, rtol=rtol), \
            f"mismatch vs reference (config {idx})"

    print("KERNEL_OK")
</pallas_src>

<mosaic_0001>
module attributes {stable_mosaic.version = 11 : i64} {
  func.func @_wap_kernel(%arg0: i32, %arg1: i32, %arg2: memref<2x128x128xf32, #tpu.memory_space<vmem>>, %arg3: memref<128x128xf32, #tpu.memory_space<vmem>>, %arg4: memref<128x1xf32, #tpu.memory_space<vmem>>, %arg5: memref<2x128xf32, #tpu.memory_space<vmem>>, %arg6: memref<128x8xf32, #tpu.memory_space<vmem>>) attributes {dimension_semantics = [#tpu.dimension_semantics<parallel>, #tpu.dimension_semantics<arbitrary>], iteration_bounds = array<i64: 1, 1>, scalar_prefetch = 0 : i64, scratch_operands = 1 : i64, tpu.core_type = #tpu.core_type<tc>, window_params = [{transform_indices = @transform_0, window_bounds = array<i64: 2, 128, 128>}, {pipeline_mode = #tpu.pipeline_mode<synchronous>, transform_indices = @transform_1, window_bounds = array<i64: 128, 128>}, {pipeline_mode = #tpu.pipeline_mode<synchronous>, transform_indices = @transform_2, window_bounds = array<i64: 128, 1>}, {transform_indices = @transform_3, window_bounds = array<i64: 2, 128>}]} {
    %c0_i32 = arith.constant 0 : i32
    %0 = arith.cmpi eq, %arg1, %c0_i32 : i32
    %1 = arith.extui %0 : i1 to i32
    %c0_i32_0 = arith.constant 0 : i32
    %2 = arith.cmpi ne, %1, %c0_i32_0 : i32
    scf.if %2 {
      %cst_12 = arith.constant 0.000000e+00 : f32
      %17 = vector.broadcast %cst_12 : f32 to vector<128x8xf32>
      %c0_13 = arith.constant 0 : index
      %c0_14 = arith.constant 0 : index
      %18 = vector.load %arg6[%c0_13, %c0_14] : memref<128x8xf32, #tpu.memory_space<vmem>>, vector<128x8xf32>
      tpu.vector_store %arg6[%c0_13, %c0_14], %17 {strides = array<i32>} : memref<128x8xf32, #tpu.memory_space<vmem>>, vector<128x8xf32>,
    } else {
    }
    %c0 = arith.constant 0 : index
    %c0_1 = arith.constant 0 : index
    %3 = vector.load %arg3[%c0, %c0_1] : memref<128x128xf32, #tpu.memory_space<vmem>>, vector<128x128xf32>
    %c0_2 = arith.constant 0 : index
    %c0_3 = arith.constant 0 : index
    %4 = vector.load %arg4[%c0_2, %c0_3] : memref<128x1xf32, #tpu.memory_space<vmem>>, vector<128x1xf32>
    %5 = vector.shape_cast %4 : vector<128x1xf32> to vector<128x1xf32>
    %6 = vector.broadcast %5 : vector<128x1xf32> to vector<128x128xf32>
    %7 = tpu.iota {dimensions = array<i32: 1>} : vector<128x8xi32>
    %cst = arith.constant 0.000000e+00 : f32
    %8 = vector.broadcast %cst : f32 to vector<128x8xf32>
    %c0_i32_4 = arith.constant 0 : i32
    %c2_i32 = arith.constant 2 : i32
    %9 = arith.addi %c0_i32_4, %c2_i32 : i32
    %c1_i32 = arith.constant 1 : i32
    %10 = scf.for %arg7 = %c0_i32_4 to %9 step %c1_i32 iter_args(%arg8 = %8) -> (vector<128x8xf32>)  : i32 {
      %17 = arith.index_cast %arg7 : i32 to index
      %c0_12 = arith.constant 0 : index
      %c0_13 = arith.constant 0 : index
      %18 = vector.load %arg2[%17, %c0_12, %c0_13] : memref<2x128x128xf32, #tpu.memory_space<vmem>>, vector<1x128x128xf32>
      %19 = vector.shape_cast %18 : vector<1x128x128xf32> to vector<128x128xf32>
      %cst_14 = arith.constant dense<0.000000e+00> : vector<128x128xf32>
      %20 = tpu.matmul %3, %19, %cst_14 {dimension_numbers = #tpu.dot_dimension_numbers<[1], [0], [0], [1], [0, 0, 1, 1], [], []>} : vector<128x128xf32>, vector<128x128xf32>, vector<128x128xf32> -> vector<128x128xf32>
      %21 = arith.addf %20, %6 : vector<128x128xf32>
      %cst_15 = arith.constant 5.000000e-01 : f32
      %22 = vector.broadcast %cst_15 : f32 to vector<128x128xf32>
      %23 = arith.mulf %22, %21 : vector<128x128xf32>
      %24 = math.tanh %23 : vector<128x128xf32>
      %cst_16 = arith.constant 5.000000e-01 : f32
      %25 = vector.broadcast %cst_16 : f32 to vector<128x128xf32>
      %26 = arith.mulf %25, %24 : vector<128x128xf32>
      %cst_17 = arith.constant 5.000000e-01 : f32
      %27 = vector.broadcast %cst_17 : f32 to vector<128x128xf32>
      %28 = arith.addf %26, %27 : vector<128x128xf32>
      %29 = arith.mulf %28, %19 : vector<128x128xf32>
      %cst_18 = arith.constant dense<0.000000e+00> : vector<128xf32>
      %30 = vector.multi_reduction <add>, %29, %cst_18 [1] : vector<128x128xf32> to vector<128xf32>
      %31 = vector.shape_cast %30 : vector<128xf32> to vector<128x1xf32>
      %32 = vector.broadcast %arg7 : i32 to vector<128x8xi32>
      %33 = arith.cmpi eq, %7, %32 : vector<128x8xi32>
      %34 = vector.shape_cast %31 : vector<128x1xf32> to vector<128x1xf32>
      %35 = vector.broadcast %34 : vector<128x1xf32> to vector<128x8xf32>
      %36 = arith.select %33, %35, %arg8 : vector<128x8xi1>, vector<128x8xf32>
      scf.yield %36 : vector<128x8xf32>
    }
    %c2_i32_5 = arith.constant 2 : i32
    %c0_6 = arith.constant 0 : index
    %c0_7 = arith.constant 0 : index
    %11 = vector.load %arg6[%c0_6, %c0_7] : memref<128x8xf32, #tpu.memory_space<vmem>>, vector<128x8xf32>
    %12 = arith.addf %11, %10 : vector<128x8xf32>
    %c0_8 = arith.constant 0 : index
    %c0_9 = arith.constant 0 : index
    %13 = vector.load %arg6[%c0_8, %c0_9] : memref<128x8xf32, #tpu.memory_space<vmem>>, vector<128x8xf32>
    tpu.vector_store %arg6[%c0_8, %c0_9], %12 {strides = array<i32>} : memref<128x8xf32, #tpu.memory_space<vmem>>, vector<128x8xf32>,
    %c0_i32_10 = arith.constant 0 : i32
    %14 = arith.cmpi eq, %arg1, %c0_i32_10 : i32
    %15 = arith.extui %14 : i1 to i32
    %c0_i32_11 = arith.constant 0 : i32
    %16 = arith.cmpi ne, %15, %c0_i32_11 : i32
    scf.if %16 {
      %c0_12 = arith.constant 0 : index
      %c0_13 = arith.constant 0 : index
      %17 = vector.load %arg6[%c0_12, %c0_13] : memref<128x8xf32, #tpu.memory_space<vmem>>, vector<128x8xf32>
      %cst_14 = arith.constant 1.562500e-02 : f32
      %18 = vector.broadcast %cst_14 : f32 to vector<128x8xf32>
      %19 = arith.mulf %17, %18 : vector<128x8xf32>
      %20 = tpu.transpose %19, [1, 0] : vector<128x8xf32> -> vector<8x128xf32>
      %21 = vector.extract_strided_slice %20 {offsets = [0, 0], sizes = [2, 128], strides = [1, 1]} : vector<8x128xf32> to vector<2x128xf32>
      %c0_15 = arith.constant 0 : index
      %c0_16 = arith.constant 0 : index
      %22 = vector.load %arg5[%c0_15, %c0_16] : memref<2x128xf32, #tpu.memory_space<vmem>>, vector<2x128xf32>
      tpu.vector_store %arg5[%c0_15, %c0_16], %21 {strides = array<i32>} : memref<2x128xf32, #tpu.memory_space<vmem>>, vector<2x128xf32>,
    } else {
    }
    return
  }
  func.func @transform_0(%arg0: i32, %arg1: i32) -> (i32, i32, i32) {
    %c0_i32 = arith.constant 0 : i32
    %c0_i32_0 = arith.constant 0 : i32
    return %arg0, %c0_i32, %arg1 : i32, i32, i32
  }
  func.func @transform_1(%arg0: i32, %arg1: i32) -> (i32, i32) {
    %c0_i32 = arith.constant 0 : i32
    %c0_i32_0 = arith.constant 0 : i32
    %c0_i32_1 = arith.constant 0 : i32
    return %c0_i32, %c0_i32_0 : i32, i32
  }
  func.func @transform_2(%arg0: i32, %arg1: i32) -> (i32, i32) {
    %c0_i32 = arith.constant 0 : i32
    %c0_i32_0 = arith.constant 0 : i32
    %c0_i32_1 = arith.constant 0 : i32
    return %c0_i32, %c0_i32_0 : i32, i32
  }
  func.func @transform_3(%arg0: i32, %arg1: i32) -> (i32, i32) {
    %c0_i32 = arith.constant 0 : i32
    %c0_i32_0 = arith.constant 0 : i32
    return %arg0, %c0_i32 : i32, i32
  }
}

</mosaic_0001>

<llo_original>
// kernel: tpu_custom_call.1
$region0: #{tpu_custom_call.1}
  #allocation0 [shape = 'u32[]', space=smem, size = 0x4, offset = 0x4, fixed_abs, tag = 'smem constant byte address 0x4 - core index']
  #allocation1 [shape = 'u32[72,128]{1,0:T(1,128)}', space=vmem, size = 0x9000, scoped, tag = 'internal scratch']
  #allocation2 [shape = 'f32[128,8]{1,0:T(8,128)}', space=vmem, size = 0x10000, scoped, tag = 'scratch operand']
  %s0 = inlined_call_operand.hbm [shape: f32[2,128,128], index: 0, kind: input, shape index: {}]
  %s1 = inlined_call_operand.vmem [shape: f32[128,128], index: 1, kind: input, shape index: {}]
  %s2 = inlined_call_operand.vmem [shape: f32[128,1], index: 2, kind: input, shape index: {}]
  %s3 = inlined_call_operand.hbm [shape: f32[2,128], index: 3, kind: output, shape index: {}]
  %s4 = sld [smem:[#allocation0]]
  $region41: #{tpu_custom_call.1} parent=0
    _
  %s6 = ssub.s32 1, %s4
  %s7 = scalar_select 0, %s6, %s4
  $region1: #{tpu_custom_call.1} parent=0
    #allocation3 [shape = 'u8[131072]{0}', space=vmem, size = 0x20000, scoped, tag = 'input window, operand 0, single buffered']
    #allocation4 [shape = 's32[1]{0}', space=sflag, size = 0x4, scoped, tag = 'scoped memory for tpu_custom_call.1']
    #allocation5 [shape = 's32[1]{0}', space=sflag, size = 0x4, scoped, tag = 'scoped memory for tpu_custom_call.1']
    #allocation6 [shape = 'u8[1024]{0}', space=vmem, size = 0x400, scoped, tag = 'output window, operand 0, single buffered']
    %8 = vsyncpa [#allocation4], 0
    %9 = vsyncpa [#allocation5], 0
    // Predicated region
    $region2: #{tpu_custom_call.1} parent=1 // pred_check
      _
    $region3: #{tpu_custom_call.1} parent=1 // pred_check_branch
      %11 = sbr.rel (0) target = $region5
    $region4: #{tpu_custom_call.1} parent=1 // pred_region
      %13 = vsyncadd [#allocation4], 0
      %s14 = sshll.u32 %s0, 4
      %s15 = int_to_ptr.hbm [resolvable:$true] %s14
      %s16 = sshll.u32 [#allocation3], 4
      %s17 = int_to_ptr.vmem [resolvable:$true] %s16
      %22 = dma.hbm_to_vmem [thread:$0]  %s15, 4096, %s17, [#allocation4], 128, 128, 8
    $region5: #{tpu_custom_call.1} parent=1 // pred_fallthru
      _
    // Predicated region
    $region6: #{tpu_custom_call.1} parent=1 // pred_check
      _
    $region7: #{tpu_custom_call.1} parent=1 // pred_check_branch
      %24 = sbr.rel (0) target = $region9
    $region8: #{tpu_custom_call.1} parent=1 // pred_region
      _
    $region9: #{tpu_custom_call.1} parent=1 // pred_fallthru
      _
    // Predicated region
    $region10: #{tpu_custom_call.1} parent=1 // pred_check
      _
    $region11: #{tpu_custom_call.1} parent=1 // pred_check_branch
      %26 = sbr.rel (0) target = $region13
    $region12: #{tpu_custom_call.1} parent=1 // pred_region
      _
    $region13: #{tpu_custom_call.1} parent=1 // pred_fallthru
      _
    // Predicated region
    $region14: #{tpu_custom_call.1} parent=1 // pred_check
      _
    $region15: #{tpu_custom_call.1} parent=1 // pred_check_branch
      %28 = sbr.rel (0) target = $region17
    $region16: #{tpu_custom_call.1} parent=1 // pred_region
      %30 = dma.done [#allocation4], 4096
    $region17: #{tpu_custom_call.1} parent=1 // pred_fallthru
      _
    %p31 = scmp.eq.s32.totalorder 0, 0
    // Predicated region
    $region18: #{tpu_custom_call.1} parent=1 // pred_check
      %p32 = pneg %p31
    $region19: #{tpu_custom_call.1} parent=1 // pred_check_branch
      %34 = sbr.rel (%p32) target = $region21
    $region20: #{tpu_custom_call.1} parent=1 // pred_region
      %vm35 = vcmask 64512
      %36 = vst.msk [vmem:[#allocation2] sm:$0xff] %vm35, 0.0
      %37 = vst.msk [vmem:[#allocation2 + $0x8] sm:$0xff] %vm35, 0.0
      %38 = vst.msk [vmem:[#allocation2 + $0x10] sm:$0xff] %vm35, 0.0
      %39 = vst.msk [vmem:[#allocation2 + $0x18] sm:$0xff] %vm35, 0.0
      %40 = vst.msk [vmem:[#allocation2 + $0x20] sm:$0xff] %vm35, 0.0
      %41 = vst.msk [vmem:[#allocation2 + $0x28] sm:$0xff] %vm35, 0.0
      %42 = vst.msk [vmem:[#allocation2 + $0x30] sm:$0xff] %vm35, 0.0
      %43 = vst.msk [vmem:[#allocation2 + $0x38] sm:$0xff] %vm35, 0.0
      %44 = vst.msk [vmem:[#allocation2 + $0x40] sm:$0xff] %vm35, 0.0
      %45 = vst.msk [vmem:[#allocation2 + $0x48] sm:$0xff] %vm35, 0.0
      %46 = vst.msk [vmem:[#allocation2 + $0x50] sm:$0xff] %vm35, 0.0
      %47 = vst.msk [vmem:[#allocation2 + $0x58] sm:$0xff] %vm35, 0.0
      %48 = vst.msk [vmem:[#allocation2 + $0x60] sm:$0xff] %vm35, 0.0
      %49 = vst.msk [vmem:[#allocation2 + $0x68] sm:$0xff] %vm35, 0.0
      %50 = vst.msk [vmem:[#allocation2 + $0x70] sm:$0xff] %vm35, 0.0
      %51 = vst.msk [vmem:[#allocation2 + $0x78] sm:$0xff] %vm35, 0.0
    $region21: #{tpu_custom_call.1} parent=1 // pred_fallthru
      _
    %v52 = vld [vmem:[%s1] sm:$0xff]
    %v53 = vld [vmem:[%s1 + $0x8] sm:$0xff]
    %v54 = vld [vmem:[%s1 + $0x10] sm:$0xff]
    %v55 = vld [vmem:[%s1 + $0x18] sm:$0xff]
    %v56 = vld [vmem:[%s1 + $0x20] sm:$0xff]
    %v57 = vld [vmem:[%s1 + $0x28] sm:$0xff]
    %v58 = vld [vmem:[%s1 + $0x30] sm:$0xff]
    %v59 = vld [vmem:[%s1 + $0x38] sm:$0xff]
    %v60 = vld [vmem:[%s1 + $0x40] sm:$0xff]
    %v61 = vld [vmem:[%s1 + $0x48] sm:$0xff]
    %v62 = vld [vmem:[%s1 + $0x50] sm:$0xff]
    %v63 = vld [vmem:[%s1 + $0x58] sm:$0xff]
    %v64 = vld [vmem:[%s1 + $0x60] sm:$0xff]
    %v65 = vld [vmem:[%s1 + $0x68] sm:$0xff]
    %v66 = vld [vmem:[%s1 + $0x70] sm:$0xff]
    %v67 = vld [vmem:[%s1 + $0x78] sm:$0xff]
    %v68 = vld [vmem:[%s2] sm:$0xff]
    %v69 = vld [vmem:[%s2 + $0x8] sm:$0xff]
    %v70 = vld [vmem:[%s2 + $0x10] sm:$0xff]
    %v71 = vld [vmem:[%s2 + $0x18] sm:$0xff]
    %v72 = vld [vmem:[%s2 + $0x20] sm:$0xff]
    %v73 = vld [vmem:[%s2 + $0x28] sm:$0xff]
    %v74 = vld [vmem:[%s2 + $0x30] sm:$0xff]
    %v75 = vld [vmem:[%s2 + $0x38] sm:$0xff]
    %v76 = vld [vmem:[%s2 + $0x40] sm:$0xff]
    %v77 = vld [vmem:[%s2 + $0x48] sm:$0xff]
    %v78 = vld [vmem:[%s2 + $0x50] sm:$0xff]
    %v79 = vld [vmem:[%s2 + $0x58] sm:$0xff]
    %v80 = vld [vmem:[%s2 + $0x60] sm:$0xff]
    %v81 = vld [vmem:[%s2 + $0x68] sm:$0xff]
    %v82 = vld [vmem:[%s2 + $0x70] sm:$0xff]
    %v83 = vld [vmem:[%s2 + $0x78] sm:$0xff]
    %85 = vset.pattern.permute.xlu0 0
    %86 = vperm.xlu0 %85, %v68
    %v87 = vpop.permute.xlu0 %86
    %90 = vset.pattern.permute.xlu0 0
    %91 = vperm.xlu0 %90, %v69
    %v92 = vpop.permute.xlu0 %91
    %95 = vset.pattern.permute.xlu0 0
    %96 = vperm.xlu0 %95, %v70
    %v97 = vpop.permute.xlu0 %96
    %100 = vset.pattern.permute.xlu0 0
    %101 = vperm.xlu0 %100, %v71
    %v102 = vpop.permute.xlu0 %101
    %105 = vset.pattern.permute.xlu0 0
    %106 = vperm.xlu0 %105, %v72
    %v107 = vpop.permute.xlu0 %106
    %110 = vset.pattern.permute.xlu0 0
    %111 = vperm.xlu0 %110, %v73
    %v112 = vpop.permute.xlu0 %111
    %115 = vset.pattern.permute.xlu0 0
    %116 = vperm.xlu0 %115, %v74
    %v117 = vpop.permute.xlu0 %116
    %120 = vset.pattern.permute.xlu0 0
    %121 = vperm.xlu0 %120, %v75
    %v122 = vpop.permute.xlu0 %121
    %125 = vset.pattern.permute.xlu0 0
    %126 = vperm.xlu0 %125, %v76
    %v127 = vpop.permute.xlu0 %126
    %130 = vset.pattern.permute.xlu0 0
    %131 = vperm.xlu0 %130, %v77
    %v132 = vpop.permute.xlu0 %131
    %135 = vset.pattern.permute.xlu0 0
    %136 = vperm.xlu0 %135, %v78
    %v137 = vpop.permute.xlu0 %136
    %140 = vset.pattern.permute.xlu0 0
    %141 = vperm.xlu0 %140, %v79
    %v142 = vpop.permute.xlu0 %141
    %145 = vset.pattern.permute.xlu0 0
    %146 = vperm.xlu0 %145, %v80
    %v147 = vpop.permute.xlu0 %146
    %150 = vset.pattern.permute.xlu0 0
    %151 = vperm.xlu0 %150, %v81
    %v152 = vpop.permute.xlu0 %151
    %155 = vset.pattern.permute.xlu0 0
    %156 = vperm.xlu0 %155, %v82
    %v157 = vpop.permute.xlu0 %156
    %160 = vset.pattern.permute.xlu0 0
    %161 = vperm.xlu0 %160, %v83
    %v162 = vpop.permute.xlu0 %161
    %v164 = vlaneseq
    %v165 = vand.u32 %v164, 127
    loop: start=0, step=1, limit=2
    $region22: #{tpu_custom_call.1} parent=1 // loop_pre_header
      _
    $region23: #{tpu_custom_call.1} parent=1 // loop_header
      %s167 = sphi 0, %s171
      %p168 = scmp.ge.s32.totalorder %s167, 2
      %v172 = vphi 0.0, %v385
      %v173 = vphi 0.0, %v386
      %v174 = vphi 0.0, %v387
      %v175 = vphi 0.0, %v388
      %v176 = vphi 0.0, %v389
      %v177 = vphi 0.0, %v390
      %v178 = vphi 0.0, %v391
      %v179 = vphi 0.0, %v392
      %v180 = vphi 0.0, %v393
      %v181 = vphi 0.0, %v394
      %v182 = vphi 0.0, %v395
      %v183 = vphi 0.0, %v396
      %v184 = vphi 0.0, %v397
      %v185 = vphi 0.0, %v398
      %v186 = vphi 0.0, %v399
      %v187 = vphi 0.0, %v400
    $region24: #{tpu_custom_call.1} parent=1 // loop_header_branch
      %170 = sbr.rel (%p168) target = $region28
    $region25: #{tpu_custom_call.1} parent=1 // loop_body
      %s188 = smul.u32 %s167, 128
      %s189 = scalar_lea.vmem [#allocation3], %s188
      %v190 = vld [vmem:[%s189] sm:$0xff]
      %v191 = vld [vmem:[%s189 + $0x8] sm:$0xff]
      %v192 = vld [vmem:[%s189 + $0x10] sm:$0xff]
      %v193 = vld [vmem:[%s189 + $0x18] sm:$0xff]
      %v194 = vld [vmem:[%s189 + $0x20] sm:$0xff]
      %v195 = vld [vmem:[%s189 + $0x28] sm:$0xff]
      %v196 = vld [vmem:[%s189 + $0x30] sm:$0xff]
      %v197 = vld [vmem:[%s189 + $0x38] sm:$0xff]
      %v198 = vld [vmem:[%s189 + $0x40] sm:$0xff]
      %v199 = vld [vmem:[%s189 + $0x48] sm:$0xff]
      %v200 = vld [vmem:[%s189 + $0x50] sm:$0xff]
      %v201 = vld [vmem:[%s189 + $0x58] sm:$0xff]
      %v202 = vld [vmem:[%s189 + $0x60] sm:$0xff]
      %v203 = vld [vmem:[%s189 + $0x68] sm:$0xff]
      %v204 = vld [vmem:[%s189 + $0x70] sm:$0xff]
      %v205 = vld [vmem:[%s189 + $0x78] sm:$0xff]
      %206 = vmatpush.msra.mxu0 %v205
      %207 = vmatpush.msra.mxu0 %v204
      %208 = vmatpush.msra.mxu0 %v203
      %209 = vmatpush.msra.mxu0 %v202
      %210 = vmatpush.msra.mxu0 %v201
      %211 = vmatpush.msra.mxu0 %v200
      %212 = vmatpush.msra.mxu0 %v199
      %213 = vmatpush.msra.mxu0 %v198
      %214 = vmatpush.msra.mxu0 %v197
      %215 = vmatpush.msra.mxu0 %v196
      %216 = vmatpush.msra.mxu0 %v195
      %217 = vmatpush.msra.mxu0 %v194
      %218 = vmatpush.msra.mxu0 %v193
      %219 = vmatpush.msra.mxu0 %v192
      %220 = vmatpush.msra.mxu0 %v191
      %221 = vmatpush.msra.mxu0 %v190
      %222 = vmatmul.f32.gmra.mxu0 %v52
      %v223 = vpop.f32.mrf.mxu0
      %v224 = vadd.f32 %v87, %v223
      %225 = vmatmul.f32.gmra.mxu0 %v53
      %v226 = vpop.f32.mrf.mxu0
      %v227 = vadd.f32 %v92, %v226
      %228 = vmatmul.f32.gmra.mxu0 %v54
      %v229 = vpop.f32.mrf.mxu0
      %v230 = vadd.f32 %v97, %v229
      %231 = vmatmul.f32.gmra.mxu0 %v55
      %v232 = vpop.f32.mrf.mxu0
      %v233 = vadd.f32 %v102, %v232
      %234 = vmatmul.f32.gmra.mxu0 %v56
      %v235 = vpop.f32.mrf.mxu0
      %v236 = vadd.f32 %v107, %v235
      %237 = vmatmul.f32.gmra.mxu0 %v57
      %v238 = vpop.f32.mrf.mxu0
      %v239 = vadd.f32 %v112, %v238
      %240 = vmatmul.f32.gmra.mxu0 %v58
      %v241 = vpop.f32.mrf.mxu0
      %v242 = vadd.f32 %v117, %v241
      %243 = vmatmul.f32.gmra.mxu0 %v59
      %v244 = vpop.f32.mrf.mxu0
      %v245 = vadd.f32 %v122, %v244
      %246 = vmatmul.f32.gmra.mxu0 %v60
      %v247 = vpop.f32.mrf.mxu0
      %v248 = vadd.f32 %v127, %v247
      %249 = vmatmul.f32.gmra.mxu0 %v61
      %v250 = vpop.f32.mrf.mxu0
      %v251 = vadd.f32 %v132, %v250
      %252 = vmatmul.f32.gmra.mxu0 %v62
      %v253 = vpop.f32.mrf.mxu0
      %v254 = vadd.f32 %v137, %v253
      %255 = vmatmul.f32.gmra.mxu0 %v63
      %v256 = vpop.f32.mrf.mxu0
      %v257 = vadd.f32 %v142, %v256
      %258 = vmatmul.f32.gmra.mxu0 %v64
      %v259 = vpop.f32.mrf.mxu0
      %v260 = vadd.f32 %v147, %v259
      %261 = vmatmul.f32.gmra.mxu0 %v65
      %v262 = vpop.f32.mrf.mxu0
      %v263 = vadd.f32 %v152, %v262
      %264 = vmatmul.f32.gmra.mxu0 %v66
      %v265 = vpop.f32.mrf.mxu0
      %v266 = vadd.f32 %v157, %v265
      %267 = vmatmul.f32.gmra.mxu0 %v67
      %v268 = vpop.f32.mrf.mxu0
      %v269 = vadd.f32 %v162, %v268
      %270 = vdwg.mxu0
      %v271 = vmul.f32 %v224, 0.5
      %v272 = vmul.f32 %v227, 0.5
      %v273 = vmul.f32 %v230, 0.5
      %v274 = vmul.f32 %v233, 0.5
      %v275 = vmul.f32 %v236, 0.5
      %v276 = vmul.f32 %v239, 0.5
      %v277 = vmul.f32 %v242, 0.5
      %v278 = vmul.f32 %v245, 0.5
      %v279 = vmul.f32 %v248, 0.5
      %v280 = vmul.f32 %v251, 0.5
      %v281 = vmul.f32 %v254, 0.5
      %v282 = vmul.f32 %v257, 0.5
      %v283 = vmul.f32 %v260, 0.5
      %v284 = vmul.f32 %v263, 0.5
      %v285 = vmul.f32 %v266, 0.5
      %v286 = vmul.f32 %v269, 0.5
      %v287 = vtanh.pop %v271
      %v288 = vtanh.pop %v272
      %v289 = vtanh.pop %v273
      %v290 = vtanh.pop %v274
      %v291 = vtanh.pop %v275
      %v292 = vtanh.pop %v276
      %v293 = vtanh.pop %v277
      %v294 = vtanh.pop %v278
      %v295 = vtanh.pop %v279
      %v296 = vtanh.pop %v280
      %v297 = vtanh.pop %v281
      %v298 = vtanh.pop %v282
      %v299 = vtanh.pop %v283
      %v300 = vtanh.pop %v284
      %v301 = vtanh.pop %v285
      %v302 = vtanh.pop %v286
      %v303 = vmul.f32 %v287, 0.5
      %v304 = vmul.f32 %v288, 0.5
      %v305 = vmul.f32 %v289, 0.5
      %v306 = vmul.f32 %v290, 0.5
      %v307 = vmul.f32 %v291, 0.5
      %v308 = vmul.f32 %v292, 0.5
      %v309 = vmul.f32 %v293, 0.5
      %v310 = vmul.f32 %v294, 0.5
      %v311 = vmul.f32 %v295, 0.5
      %v312 = vmul.f32 %v296, 0.5
      %v313 = vmul.f32 %v297, 0.5
      %v314 = vmul.f32 %v298, 0.5
      %v315 = vmul.f32 %v299, 0.5
      %v316 = vmul.f32 %v300, 0.5
      %v317 = vmul.f32 %v301, 0.5
      %v318 = vmul.f32 %v302, 0.5
      %v319 = vadd.f32 %v303, 0.5
      %v320 = vadd.f32 %v304, 0.5
      %v321 = vadd.f32 %v305, 0.5
      %v322 = vadd.f32 %v306, 0.5
      %v323 = vadd.f32 %v307, 0.5
      %v324 = vadd.f32 %v308, 0.5
      %v325 = vadd.f32 %v309, 0.5
      %v326 = vadd.f32 %v310, 0.5
      %v327 = vadd.f32 %v311, 0.5
      %v328 = vadd.f32 %v312, 0.5
      %v329 = vadd.f32 %v313, 0.5
      %v330 = vadd.f32 %v314, 0.5
      %v331 = vadd.f32 %v315, 0.5
      %v332 = vadd.f32 %v316, 0.5
      %v333 = vadd.f32 %v317, 0.5
      %v334 = vadd.f32 %v318, 0.5
      %v335 = vmul.f32 %v319, %v190
      %v336 = vmul.f32 %v320, %v191
      %v337 = vmul.f32 %v321, %v192
      %v338 = vmul.f32 %v322, %v193
      %v339 = vmul.f32 %v323, %v194
      %v340 = vmul.f32 %v324, %v195
      %v341 = vmul.f32 %v325, %v196
      %v342 = vmul.f32 %v326, %v197
      %v343 = vmul.f32 %v327, %v198
      %v344 = vmul.f32 %v328, %v199
      %v345 = vmul.f32 %v329, %v200
      %v346 = vmul.f32 %v330, %v201
      %v347 = vmul.f32 %v331, %v202
      %v348 = vmul.f32 %v332, %v203
      %v349 = vmul.f32 %v333, %v204
      %v350 = vmul.f32 %v334, %v205
      %351 = vadd.xlane.f32.xlu0 %v335
      %v352 = vpop.xlane.xlu0 %351
      %353 = vadd.xlane.f32.xlu0 %v336
      %v354 = vpop.xlane.xlu0 %353
      %355 = vadd.xlane.f32.xlu0 %v337
      %v356 = vpop.xlane.xlu0 %355
      %357 = vadd.xlane.f32.xlu0 %v338
      %v358 = vpop.xlane.xlu0 %357
      %359 = vadd.xlane.f32.xlu0 %v339
      %v360 = vpop.xlane.xlu0 %359
      %361 = vadd.xlane.f32.xlu0 %v340
      %v362 = vpop.xlane.xlu0 %361
      %363 = vadd.xlane.f32.xlu0 %v341
      %v364 = vpop.xlane.xlu0 %363
      %365 = vadd.xlane.f32.xlu0 %v342
      %v366 = vpop.xlane.xlu0 %365
      %367 = vadd.xlane.f32.xlu0 %v343
      %v368 = vpop.xlane.xlu0 %367
      %369 = vadd.xlane.f32.xlu0 %v344
      %v370 = vpop.xlane.xlu0 %369
      %371 = vadd.xlane.f32.xlu0 %v345
      %v372 = vpop.xlane.xlu0 %371
      %373 = vadd.xlane.f32.xlu0 %v346
      %v374 = vpop.xlane.xlu0 %373
      %375 = vadd.xlane.f32.xlu0 %v347
      %v376 = vpop.xlane.xlu0 %375
      %377 = vadd.xlane.f32.xlu0 %v348
      %v378 = vpop.xlane.xlu0 %377
      %379 = vadd.xlane.f32.xlu0 %v349
      %v380 = vpop.xlane.xlu0 %379
      %381 = vadd.xlane.f32.xlu0 %v350
      %v382 = vpop.xlane.xlu0 %381
      %v383 = vstv %s167
      %vm384 = vcmp.eq.s32.totalorder %v165, %v383
      %v385 = vsel %vm384, %v352, %v172
      %v386 = vsel %vm384, %v354, %v173
      %v387 = vsel %vm384, %v356, %v174
      %v388 = vsel %vm384, %v358, %v175
      %v389 = vsel %vm384, %v360, %v176
      %v390 = vsel %vm384, %v362, %v177
      %v391 = vsel %vm384, %v364, %v178
      %v392 = vsel %vm384, %v366, %v179
      %v393 = vsel %vm384, %v368, %v180
      %v394 = vsel %vm384, %v370, %v181
      %v395 = vsel %vm384, %v372, %v182
      %v396 = vsel %vm384, %v374, %v183
      %v397 = vsel %vm384, %v376, %v184
      %v398 = vsel %vm384, %v378, %v185
      %v399 = vsel %vm384, %v380, %v186
      %v400 = vsel %vm384, %v382, %v187
    $region26: #{tpu_custom_call.1} parent=1 // loop_footer
      %s171 = sadd.s32 1, %s167
    $region27: #{tpu_custom_call.1} parent=1 // loop_footer_branch
      %166 = sbr.rel target = $region23
    $region28: #{tpu_custom_call.1} parent=1 // loop_exit
      _
    %v401 = vld [vmem:[#allocation2] sm:$0xff]
    %v402 = vld [vmem:[#allocation2 + $0x8] sm:$0xff]
    %v403 = vld [vmem:[#allocation2 + $0x10] sm:$0xff]
    %v404 = vld [vmem:[#allocation2 + $0x18] sm:$0xff]
    %v405 = vld [vmem:[#allocation2 + $0x20] sm:$0xff]
    %v406 = vld [vmem:[#allocation2 + $0x28] sm:$0xff]
    %v407 = vld [vmem:[#allocation2 + $0x30] sm:$0xff]
    %v408 = vld [vmem:[#allocation2 + $0x38] sm:$0xff]
    %v409 = vld [vmem:[#allocation2 + $0x40] sm:$0xff]
    %v410 = vld [vmem:[#allocation2 + $0x48] sm:$0xff]
    %v411 = vld [vmem:[#allocation2 + $0x50] sm:$0xff]
    %v412 = vld [vmem:[#allocation2 + $0x58] sm:$0xff]
    %v413 = vld [vmem:[#allocation2 + $0x60] sm:$0xff]
    %v414 = vld [vmem:[#allocation2 + $0x68] sm:$0xff]
    %v415 = vld [vmem:[#allocation2 + $0x70] sm:$0xff]
    %v416 = vld [vmem:[#allocation2 + $0x78] sm:$0xff]
    %v417 = vadd.f32 %v401, %v172
    %v418 = vadd.f32 %v402, %v173
    %v419 = vadd.f32 %v403, %v174
    %v420 = vadd.f32 %v404, %v175
    %v421 = vadd.f32 %v405, %v176
    %v422 = vadd.f32 %v406, %v177
    %v423 = vadd.f32 %v407, %v178
    %v424 = vadd.f32 %v408, %v179
    %v425 = vadd.f32 %v409, %v180
    %v426 = vadd.f32 %v410, %v181
    %v427 = vadd.f32 %v411, %v182
    %v428 = vadd.f32 %v412, %v183
    %v429 = vadd.f32 %v413, %v184
    %v430 = vadd.f32 %v414, %v185
    %v431 = vadd.f32 %v415, %v186
    %v432 = vadd.f32 %v416, %v187
    %vm433 = vcmask 64512
    %434 = vst.msk [vmem:[#allocation2] sm:$0xff] %vm433, %v417
    %435 = vst.msk [vmem:[#allocation2 + $0x8] sm:$0xff] %vm433, %v418
    %436 = vst.msk [vmem:[#allocation2 + $0x10] sm:$0xff] %vm433, %v419
    %437 = vst.msk [vmem:[#allocation2 + $0x18] sm:$0xff] %vm433, %v420
    %438 = vst.msk [vmem:[#allocation2 + $0x20] sm:$0xff] %vm433, %v421
    %439 = vst.msk [vmem:[#allocation2 + $0x28] sm:$0xff] %vm433, %v422
    %440 = vst.msk [vmem:[#allocation2 + $0x30] sm:$0xff] %vm433, %v423
    %441 = vst.msk [vmem:[#allocation2 + $0x38] sm:$0xff] %vm433, %v424
    %442 = vst.msk [vmem:[#allocation2 + $0x40] sm:$0xff] %vm433, %v425
    %443 = vst.msk [vmem:[#allocation2 + $0x48] sm:$0xff] %vm433, %v426
    %444 = vst.msk [vmem:[#allocation2 + $0x50] sm:$0xff] %vm433, %v427
    %445 = vst.msk [vmem:[#allocation2 + $0x58] sm:$0xff] %vm433, %v428
    %446 = vst.msk [vmem:[#allocation2 + $0x60] sm:$0xff] %vm433, %v429
    %447 = vst.msk [vmem:[#allocation2 + $0x68] sm:$0xff] %vm433, %v430
    %448 = vst.msk [vmem:[#allocation2 + $0x70] sm:$0xff] %vm433, %v431
    %449 = vst.msk [vmem:[#allocation2 + $0x78] sm:$0xff] %vm433, %v432
    // Predicated region
    $region29: #{tpu_custom_call.1} parent=1 // pred_check
      %p450 = pneg %p31
    $region30: #{tpu_custom_call.1} parent=1 // pred_check_branch
      %452 = sbr.rel (%p450) target = $region32
    $region31: #{tpu_custom_call.1} parent=1 // pred_region
      %v453 = vld [vmem:[#allocation2] sm:$0xff]
      %v454 = vld [vmem:[#allocation2 + $0x8] sm:$0xff]
      %v455 = vld [vmem:[#allocation2 + $0x10] sm:$0xff]
      %v456 = vld [vmem:[#allocation2 + $0x18] sm:$0xff]
      %v457 = vld [vmem:[#allocation2 + $0x20] sm:$0xff]
      %v458 = vld [vmem:[#allocation2 + $0x28] sm:$0xff]
      %v459 = vld [vmem:[#allocation2 + $0x30] sm:$0xff]
      %v460 = vld [vmem:[#allocation2 + $0x38] sm:$0xff]
      %v461 = vld [vmem:[#allocation2 + $0x40] sm:$0xff]
      %v462 = vld [vmem:[#allocation2 + $0x48] sm:$0xff]
      %v463 = vld [vmem:[#allocation2 + $0x50] sm:$0xff]
      %v464 = vld [vmem:[#allocation2 + $0x58] sm:$0xff]
      %v465 = vld [vmem:[#allocation2 + $0x60] sm:$0xff]
      %v466 = vld [vmem:[#allocation2 + $0x68] sm:$0xff]
      %v467 = vld [vmem:[#allocation2 + $0x70] sm:$0xff]
      %v468 = vld [vmem:[#allocation2 + $0x78] sm:$0xff]
      %v469 = vmul.f32 %v453, 0.015625
      %v470 = vmul.f32 %v454, 0.015625
      %v471 = vmul.f32 %v455, 0.015625
      %v472 = vmul.f32 %v456, 0.015625
      %v473 = vmul.f32 %v457, 0.015625
      %v474 = vmul.f32 %v458, 0.015625
      %v475 = vmul.f32 %v459, 0.015625
      %v476 = vmul.f32 %v460, 0.015625
      %v477 = vmul.f32 %v461, 0.015625
      %v478 = vmul.f32 %v462, 0.015625
      %v479 = vmul.f32 %v463, 0.015625
      %v480 = vmul.f32 %v464, 0.015625
      %v481 = vmul.f32 %v465, 0.015625
      %v482 = vmul.f32 %v466, 0.015625
      %v483 = vmul.f32 %v467, 0.015625
      %v484 = vmul.f32 %v468, 0.015625
      %485 = vxpose.xlu0.b32.start [1/16] %v469, 128
      %486 = vxpose.xlu0.b32.cont [2/16] %v470, 128
      %487 = vxpose.xlu0.b32.cont [3/16] %v471, 128
      %488 = vxpose.xlu0.b32.cont [4/16] %v472, 128
      %489 = vxpose.xlu0.b32.cont [5/16] %v473, 128
      %490 = vxpose.xlu0.b32.cont [6/16] %v474, 128
      %491 = vxpose.xlu0.b32.cont [7/16] %v475, 128
      %492 = vxpose.xlu0.b32.cont [8/16] %v476, 128
      %493 = vxpose.xlu0.b32.cont [9/16] %v477, 128
      %494 = vxpose.xlu0.b32.cont [10/16] %v478, 128
      %495 = vxpose.xlu0.b32.cont [11/16] %v479, 128
      %496 = vxpose.xlu0.b32.cont [12/16] %v480, 128
      %497 = vxpose.xlu0.b32.cont [13/16] %v481, 128
      %498 = vxpose.xlu0.b32.cont [14/16] %v482, 128
      %499 = vxpose.xlu0.b32.cont [15/16] %v483, 128
      %500 = vxpose.xlu0.b32.end [16/16] %v484, 128
      %v501 = vpop.trf.xlu0
      %v502 = vpop.trf.xlu0
      %v503 = vpop.trf.xlu0
      %v504 = vpop.trf.xlu0
      %v505 = vpop.trf.xlu0
      %v506 = vpop.trf.xlu0
      %v507 = vpop.trf.xlu0
      %v508 = vpop.trf.xlu0
      %v509 = vpop.trf.xlu0
      %v510 = vpop.trf.xlu0
      %v511 = vpop.trf.xlu0
      %v512 = vpop.trf.xlu0
      %v513 = vpop.trf.xlu0
      %v514 = vpop.trf.xlu0
      %v515 = vpop.trf.xlu0
      %v516 = vpop.trf.xlu0
      %517 = vst [vmem:[#allocation6] sm:$0x3] %v501
    $region32: #{tpu_custom_call.1} parent=1 // pred_fallthru
      _
    // Predicated region
    $region33: #{tpu_custom_call.1} parent=1 // pred_check
      _
    $region34: #{tpu_custom_call.1} parent=1 // pred_check_branch
      %519 = sbr.rel (0) target = $region36
    $region35: #{tpu_custom_call.1} parent=1 // pred_region
      %521 = vsyncadd [#allocation5], 0
      %s523 = sshll.u32 [#allocation6], 4
      %s524 = int_to_ptr.vmem [resolvable:$true] %s523
      %s525 = sshll.u32 %s3, 4
      %s526 = int_to_ptr.hbm [resolvable:$true] %s525
      %528 = dma.vmem_to_hbm [thread:$0]  %s524, 32, %s526, [#allocation5]
    $region36: #{tpu_custom_call.1} parent=1 // pred_fallthru
      _
    // Predicated region
    $region37: #{tpu_custom_call.1} parent=1 // pred_check
      _
    $region38: #{tpu_custom_call.1} parent=1 // pred_check_branch
      %530 = sbr.rel (0) target = $region40
    $region39: #{tpu_custom_call.1} parent=1 // pred_region
      %532 = dma.done [#allocation5], 32
    $region40: #{tpu_custom_call.1} parent=1 // pred_fallthru
      _
    %533 = vsyncpa [#allocation4], 1
    %534 = vsyncpa [#allocation5], 1

</llo_original>
